<compile_context>
chip_gen: v7x
topology: tpu7x:2x2x1
jax: 0.10.0
libtpu: 0.0.40
codegen_flags: <defaults>
</compile_context>

<pallas_src>
import jax
import jax.numpy as jnp
from jax.experimental import pallas as pl
from jax.experimental.pallas import tpu as pltpu

BN_EPS = 1e-5
HIDDEN = 128          # fc1 output width (fixed by the module)
LANE = 128            # TPU lane width


def _round_up(n, m):
    return ((n + m - 1) // m) * m


def _head_kernel(x_ref, w1_ref, b1_ref, w2_ref, b2_ref, o_ref):
    # x arrives as f32; cast to bf16 on the VPU (free under the DMA roofline) so HBM only
    # carries one 4 B/elem read of x instead of a separate cast pass plus a bf16 read.
    x = x_ref[...].astype(jnp.bfloat16)

    # fc1 (eval-mode BatchNorm already folded into w1/b1): (tile_b, D)bf16 @ (D, 128)bf16 -> f32
    h = jnp.dot(x, w1_ref[...], preferred_element_type=jnp.float32)
    h = h + b1_ref[...]

    # ReLU
    h = jnp.maximum(h, 0.0)

    # Dropout(p=0.3) is identity in eval mode.
    # TODO(synk): training-mode stochastic dropout intentionally omitted; inference semantics
    # are reproduced exactly.

    # fc2: (tile_b, 128)bf16 @ (128, c_pad)bf16 -> f32 accumulate, bf16 lane-dense store.
    out = jnp.dot(h.astype(jnp.bfloat16), w2_ref[...],
                  preferred_element_type=jnp.float32) + b2_ref[...]
    o_ref[...] = out.astype(o_ref.dtype)


def _vmem_footprint(tile_b, input_dim, c_pad):
    """Bytes of VMEM the pipeline needs (double-buffered streamed tensors + resident weights)."""
    per_row = 2 * (input_dim * 4) + 2 * (c_pad * 2)          # x (f32, x2 bufs) + out (bf16, x2)
    resident = 2 * (input_dim * HIDDEN * 2                    # w1 bf16 (pipeline still 2-bufs it)
                    + HIDDEN * 4                              # b1 f32
                    + HIDDEN * c_pad * 2                      # w2 bf16
                    + c_pad * 4)                              # b2 f32
    return per_row, resident


def _pick_tile_b(batch, input_dim, c_pad, vmem_budget_bytes):
    per_row, resident = _vmem_footprint(0, input_dim, c_pad)
    avail = max(vmem_budget_bytes - resident, per_row * 16)
    tile_b = avail // per_row
    tile_b = max(16, min(int(tile_b), 2048, _round_up(batch, 16)))
    return _round_up(tile_b, 16)


def classification_head(x, params, tile_b=None, vmem_budget_bytes=40 << 20):
    """x: (batch, input_dim) f32. params: dict of f32 arrays. Returns (batch, num_classes) f32."""
    batch, input_dim = x.shape
    num_classes = params["w2"].shape[1]

    # ---- Fold eval-mode BatchNorm into fc1 (pure JAX, outside the kernel). ----
    scale = params["gamma"] * jax.lax.rsqrt(params["running_var"] + BN_EPS)       # (1, 128)
    w1_eff = (params["w1"] * scale).astype(jnp.bfloat16)                           # (D, 128)
    b1_eff = (params["b1"] - params["running_mean"]) * scale + params["beta"]      # (1, 128) f32

    # ---- Pad num_classes up to the lane width for lane-dense (unmasked) output stores. ----
    c_pad = _round_up(max(num_classes, 1), LANE)
    w2_p = jnp.zeros((HIDDEN, c_pad), jnp.bfloat16).at[:, :num_classes].set(
        params["w2"].astype(jnp.bfloat16))
    b2_p = jnp.zeros((1, c_pad), jnp.float32).at[:, :num_classes].set(params["b2"])

    # ---- Batch tiling: VMEM-budgeted, multiple of 16; ragged last block handled by Pallas. ----
    if tile_b is None:
        tile_b = _pick_tile_b(batch, input_dim, c_pad, vmem_budget_bytes)
    tile_b = max(16, _round_up(int(tile_b), 16))
    grid = (pl.cdiv(batch, tile_b),)

    per_row, resident = _vmem_footprint(tile_b, input_dim, c_pad)
    vmem_need = resident + per_row * tile_b + (1 << 20)       # +1 MiB slack for misc scratch
    vmem_limit = int(min(max(vmem_need, 16 << 20), 48 << 20))  # safe on v5e/v6e/v7x

    flops = 2 * batch * input_dim * HIDDEN + 2 * batch * HIDDEN * c_pad
    bytes_accessed = (batch * input_dim * 4                    # x read (f32)
                      + w1_eff.size * 2 + w2_p.size * 2        # bf16 weights
                      + b1_eff.size * 4 + b2_p.size * 4        # f32 biases
                      + batch * c_pad * 2)                     # bf16 logits write

    out = pl.pallas_call(
        _head_kernel,
        out_shape=jax.ShapeDtypeStruct((batch, c_pad), jnp.bfloat16),
        grid=grid,
        in_specs=[
            pl.BlockSpec((tile_b, input_dim), lambda i: (i, 0)),   # x streams over batch
            pl.BlockSpec((input_dim, HIDDEN), lambda i: (0, 0)),   # w1_eff (constant index)
            pl.BlockSpec((1, HIDDEN), lambda i: (0, 0)),           # b1_eff
            pl.BlockSpec((HIDDEN, c_pad), lambda i: (0, 0)),       # w2
            pl.BlockSpec((1, c_pad), lambda i: (0, 0)),            # b2
        ],
        out_specs=pl.BlockSpec((tile_b, c_pad), lambda i: (i, 0)),
        compiler_params=pltpu.CompilerParams(
            dimension_semantics=("parallel",),
            vmem_limit_bytes=vmem_limit,
        ),
        cost_estimate=pl.CostEstimate(
            flops=int(flops), transcendentals=0, bytes_accessed=int(bytes_accessed)),
    )(x, w1_eff, b1_eff, w2_p, b2_p)

    # Trim class padding and restore the module's f32 output dtype. Throughput-critical callers
    # should jit this wrapper (so XLA fuses the slice into the consumer) or consume the padded
    # bf16 buffer directly.
    return out[:, :num_classes].astype(jnp.float32)


def init_params(key, input_dim, num_classes, hidden=HIDDEN):
    k1, k2, k3, k4 = jax.random.split(key, 4)
    # PyTorch nn.Linear default init: U(-1/sqrt(fan_in), 1/sqrt(fan_in))
    lim1 = 1.0 / jnp.sqrt(jnp.float32(input_dim))
    lim2 = 1.0 / jnp.sqrt(jnp.float32(hidden))
    return {
        # stored pre-transposed: (in, out)
        "w1": jax.random.uniform(k1, (input_dim, hidden), jnp.float32, -lim1, lim1),
        "b1": jax.random.uniform(k2, (1, hidden), jnp.float32, -lim1, lim1),
        "gamma": jnp.ones((1, hidden), jnp.float32),
        "beta": jnp.zeros((1, hidden), jnp.float32),
        "running_mean": jnp.zeros((1, hidden), jnp.float32),
        "running_var": jnp.ones((1, hidden), jnp.float32),
        "w2": jax.random.uniform(k3, (hidden, num_classes), jnp.float32, -lim2, lim2),
        "b2": jax.random.uniform(k4, (1, num_classes), jnp.float32, -lim2, lim2),
    }


def reference(x, p):
    """Pure-f32 JAX reference matching the PyTorch module in eval mode."""
    h = x @ p["w1"] + p["b1"]
    h = (h - p["running_mean"]) * jax.lax.rsqrt(p["running_var"] + BN_EPS) * p["gamma"] + p["beta"]
    h = jnp.maximum(h, 0.0)
    return h @ p["w2"] + p["b2"]


if __name__ == "__main__":
    key = jax.random.PRNGKey(0)
    kx, kp = jax.random.split(key)

    batch, input_dim, num_classes = 40, 32, 10
    x = jax.random.normal(kx, (batch, input_dim), jnp.float32)
    params = init_params(kp, input_dim, num_classes)
    ref = reference(x, params)

    # tile_b=16 with batch=40 exercises a 3-step batch grid including a ragged last block.
    out = jax.block_until_ready(classification_head(x, params, tile_b=16))
    assert out.shape == (batch, num_classes)
    assert jnp.allclose(out, ref, atol=3e-2, rtol=3e-2), float(jnp.max(jnp.abs(out - ref)))

    # Default (VMEM-budgeted) tile path: single ragged block covering the whole batch.
    out2 = jax.block_until_ready(classification_head(x, params))
    assert out2.shape == (batch, num_classes)
    assert jnp.allclose(out2, ref, atol=3e-2, rtol=3e-2), float(jnp.max(jnp.abs(out2 - ref)))

    print("KERNEL_OK")
</pallas_src>

<mosaic_0001>
module attributes {stable_mosaic.version = 11 : i64} {
  func.func @_head_kernel(%arg0: i32, %arg1: memref<16x32xf32, #tpu.memory_space<vmem>>, %arg2: memref<32x128xbf16, #tpu.memory_space<vmem>>, %arg3: memref<1x128xf32, #tpu.memory_space<vmem>>, %arg4: memref<128x128xbf16, #tpu.memory_space<vmem>>, %arg5: memref<1x128xf32, #tpu.memory_space<vmem>>, %arg6: memref<16x128xbf16, #tpu.memory_space<vmem>>) attributes {dimension_semantics = [#tpu.dimension_semantics<parallel>], iteration_bounds = array<i64: 3>, scalar_prefetch = 0 : i64, scratch_operands = 0 : i64, tpu.core_type = #tpu.core_type<tc>, window_params = [{transform_indices = @transform_0, window_bounds = array<i64: 16, 32>}, {pipeline_mode = #tpu.pipeline_mode<synchronous>, transform_indices = @transform_1, window_bounds = array<i64: 32, 128>}, {pipeline_mode = #tpu.pipeline_mode<synchronous>, transform_indices = @transform_2, window_bounds = array<i64: 1, 128>}, {pipeline_mode = #tpu.pipeline_mode<synchronous>, transform_indices = @transform_3, window_bounds = array<i64: 128, 128>}, {pipeline_mode = #tpu.pipeline_mode<synchronous>, transform_indices = @transform_4, window_bounds = array<i64: 1, 128>}, {transform_indices = @transform_5, window_bounds = array<i64: 16, 128>}]} {
    %c0 = arith.constant 0 : index
    %c0_0 = arith.constant 0 : index
    %0 = vector.load %arg1[%c0, %c0_0] : memref<16x32xf32, #tpu.memory_space<vmem>>, vector<16x32xf32>
    %1 = arith.truncf %0 : vector<16x32xf32> to vector<16x32xbf16>
    %c0_1 = arith.constant 0 : index
    %c0_2 = arith.constant 0 : index
    %2 = vector.load %arg2[%c0_1, %c0_2] : memref<32x128xbf16, #tpu.memory_space<vmem>>, vector<32x128xbf16>
    %cst = arith.constant dense<0.000000e+00> : vector<16x128xf32>
    %3 = tpu.matmul %1, %2, %cst {dimension_numbers = #tpu.dot_dimension_numbers<[1], [0], [0], [1], [0, 0, 1, 1], [], []>} : vector<16x32xbf16>, vector<32x128xbf16>, vector<16x128xf32> -> vector<16x128xf32>
    %c0_3 = arith.constant 0 : index
    %c0_4 = arith.constant 0 : index
    %4 = vector.load %arg3[%c0_3, %c0_4] : memref<1x128xf32, #tpu.memory_space<vmem>>, vector<1x128xf32>
    %5 = vector.broadcast %4 : vector<1x128xf32> to vector<16x128xf32>
    %6 = arith.addf %3, %5 : vector<16x128xf32>
    %cst_5 = arith.constant 0.000000e+00 : f32
    %7 = vector.broadcast %cst_5 : f32 to vector<16x128xf32>
    %8 = arith.maximumf %6, %7 : vector<16x128xf32>
    %9 = arith.truncf %8 : vector<16x128xf32> to vector<16x128xbf16>
    %c0_6 = arith.constant 0 : index
    %c0_7 = arith.constant 0 : index
    %10 = vector.load %arg4[%c0_6, %c0_7] : memref<128x128xbf16, #tpu.memory_space<vmem>>, vector<128x128xbf16>
    %cst_8 = arith.constant dense<0.000000e+00> : vector<16x128xf32>
    %11 = tpu.matmul %9, %10, %cst_8 {dimension_numbers = #tpu.dot_dimension_numbers<[1], [0], [0], [1], [0, 0, 1, 1], [], []>} : vector<16x128xbf16>, vector<128x128xbf16>, vector<16x128xf32> -> vector<16x128xf32>
    %c0_9 = arith.constant 0 : index
    %c0_10 = arith.constant 0 : index
    %12 = vector.load %arg5[%c0_9, %c0_10] : memref<1x128xf32, #tpu.memory_space<vmem>>, vector<1x128xf32>
    %13 = vector.broadcast %12 : vector<1x128xf32> to vector<16x128xf32>
    %14 = arith.addf %11, %13 : vector<16x128xf32>
    %15 = arith.truncf %14 : vector<16x128xf32> to vector<16x128xbf16>
    %c0_11 = arith.constant 0 : index
    %c0_12 = arith.constant 0 : index
    %16 = vector.load %arg6[%c0_11, %c0_12] : memref<16x128xbf16, #tpu.memory_space<vmem>>, vector<16x128xbf16>
    tpu.vector_store %arg6[%c0_11, %c0_12], %15 {strides = array<i32>} : memref<16x128xbf16, #tpu.memory_space<vmem>>, vector<16x128xbf16>,
    return
  }
  func.func @transform_0(%arg0: i32) -> (i32, i32) {
    %c0_i32 = arith.constant 0 : i32
    %c0_i32_0 = arith.constant 0 : i32
    return %arg0, %c0_i32 : i32, i32
  }
  func.func @transform_1(%arg0: i32) -> (i32, i32) {
    %c0_i32 = arith.constant 0 : i32
    %c0_i32_0 = arith.constant 0 : i32
    %c0_i32_1 = arith.constant 0 : i32
    return %c0_i32, %c0_i32_0 : i32, i32
  }
  func.func @transform_2(%arg0: i32) -> (i32, i32) {
    %c0_i32 = arith.constant 0 : i32
    %c0_i32_0 = arith.constant 0 : i32
    %c0_i32_1 = arith.constant 0 : i32
    return %c0_i32, %c0_i32_0 : i32, i32
  }
  func.func @transform_3(%arg0: i32) -> (i32, i32) {
    %c0_i32 = arith.constant 0 : i32
    %c0_i32_0 = arith.constant 0 : i32
    %c0_i32_1 = arith.constant 0 : i32
    return %c0_i32, %c0_i32_0 : i32, i32
  }
  func.func @transform_4(%arg0: i32) -> (i32, i32) {
    %c0_i32 = arith.constant 0 : i32
    %c0_i32_0 = arith.constant 0 : i32
    %c0_i32_1 = arith.constant 0 : i32
    return %c0_i32, %c0_i32_0 : i32, i32
  }
  func.func @transform_5(%arg0: i32) -> (i32, i32) {
    %c0_i32 = arith.constant 0 : i32
    %c0_i32_0 = arith.constant 0 : i32
    return %arg0, %c0_i32 : i32, i32
  }
}

</mosaic_0001>

<llo_original>
// kernel: tpu_custom_call.1
$region0: #{tpu_custom_call.1}
  #allocation0 [shape = 'u32[]', space=smem, size = 0x4, offset = 0x4, fixed_abs, tag = 'smem constant byte address 0x4 - core index']
  #allocation1 [shape = 'u32[144,128]{1,0:T(1,128)}', space=vmem, size = 0x12000, scoped, tag = 'internal scratch']
  %s0 = inlined_call_operand.vmem [shape: f32[40,32], index: 0, kind: input, shape index: {}]
  %s1 = inlined_call_operand.vmem [shape: bf16[32,128], index: 1, kind: input, shape index: {}]
  %s2 = inlined_call_operand.vmem [shape: f32[1,128], index: 2, kind: input, shape index: {}]
  %s3 = inlined_call_operand.vmem [shape: bf16[128,128], index: 3, kind: input, shape index: {}]
  %s4 = inlined_call_operand.vmem [shape: f32[1,128], index: 4, kind: input, shape index: {}]
  %s5 = inlined_call_operand.hbm [shape: bf16[40,128], index: 5, kind: output, shape index: {}]
  %s6 = sld [smem:[#allocation0]]
  $region53: #{tpu_custom_call.1} parent=0
    _
  %s8 = ssub.s32 1, %s6
  %s9 = scalar_select 0, %s8, %s6
  $region1: #{tpu_custom_call.1} parent=0
    #allocation2 [shape = 'u8[8192]{0}', space=vmem, size = 0x2000, scoped, tag = 'output window, operand 0']
    #allocation3 [shape = 's32[2]{0}', space=sflag, size = 0x8, scoped, tag = 'scoped memory for tpu_custom_call.1']
    %10 = vsyncpa [#allocation3], 0
    %s11 = scalar_lea.sflag [#allocation3], 1
    %12 = vsyncpa %s11, 0
    loop: start=0, step=1, limit=5
    $region2: #{tpu_custom_call.1} parent=1 // loop_pre_header
      _
    $region3: #{tpu_custom_call.1} parent=1 // loop_header
      %s14 = sphi 0, %s18
      %p15 = scmp.ge.s32.totalorder %s14, 5
      %s24 = sphi 0, %s26
      %s27 = sphi 0, %s24
      %s28 = sphi 0, %s27
      %s44 = sphi 0, %s28
      %s48 = sphi 0, %s48
      %s50 = sphi 0, %s48
      %s51 = sphi 0, %s50
      %s65 = sphi 0, %s51
      %s69 = sphi 0, %s69
      %s71 = sphi 0, %s69
      %s72 = sphi 0, %s71
      %s86 = sphi 0, %s72
      %s90 = sphi 0, %s90
      %s92 = sphi 0, %s90
      %s93 = sphi 0, %s92
      %s107 = sphi 0, %s93
      %s111 = sphi 0, %s111
      %s113 = sphi 0, %s111
      %s114 = sphi 0, %s113
      %s128 = sphi 0, %s114
      %s134 = sphi 0, %s136
      %s137 = sphi 0, %s134
      %s138 = sphi 0, %s137
      %s154 = sphi 0, %s138
    $region4: #{tpu_custom_call.1} parent=1 // loop_header_branch
      %17 = sbr.rel (%p15) target = $region8
    $region5: #{tpu_custom_call.1} parent=1 // loop_body
      %s19 = ssub.s32 %s14, 1
      %s20 = ssub.s32 %s14, 2
      %s21 = sadd.s32 %s14, 1
      %s22 = ssub.s32 %s14, %s21
      %p23 = scmp.eq.s32.totalorder %s22, 0
      %s25 = sadd.s32 %s24, 1
      %s26 = scalar_select %p23, %s24, %s25
      %p29 = pneg %p23
      %p30 = scmp.eq.s32.totalorder %s14, 2
      %p31 = por %p29, %p30
      %p32 = scmp.ne.s32.totalorder %s24, %s27
      %p33 = scmp.eq.s32.totalorder %s14, 0
      %p34 = por %p32, %p33
      %p35 = scmp.ne.s32.totalorder %s24, %s27
      %p36 = scmp.eq.s32.totalorder %s19, 2
      %p37 = por %p35, %p36
      %p38 = scmp.ne.s32.totalorder %s27, %s28
      %p39 = scmp.eq.s32.totalorder %s19, 0
      %p40 = por %p38, %p39
      %p41 = scmp.ne.s32.totalorder %s27, %s28
      %p42 = scmp.eq.s32.totalorder %s20, 2
      %p43 = por %p41, %p42
      %p45 = scmp.ne.s32.totalorder %s28, %s44
      %p46 = scmp.eq.s32.totalorder %s20, 0
      %p47 = por %p45, %p46
      %s49 = sadd.s32 %s48, 1
      %p52 = scmp.eq.s32.totalorder %s14, 2
      %p53 = scmp.ne.s32.totalorder %s48, %s50
      %p54 = scmp.eq.s32.totalorder %s14, 0
      %p55 = por %p53, %p54
      %p56 = scmp.ne.s32.totalorder %s48, %s50
      %p57 = scmp.eq.s32.totalorder %s19, 2
      %p58 = por %p56, %p57
      %p59 = scmp.ne.s32.totalorder %s50, %s51
      %p60 = scmp.eq.s32.totalorder %s19, 0
      %p61 = por %p59, %p60
      %p62 = scmp.ne.s32.totalorder %s50, %s51
      %p63 = scmp.eq.s32.totalorder %s20, 2
      %p64 = por %p62, %p63
      %p66 = scmp.ne.s32.totalorder %s51, %s65
      %p67 = scmp.eq.s32.totalorder %s20, 0
      %p68 = por %p66, %p67
      %s70 = sadd.s32 %s69, 1
      %p73 = scmp.eq.s32.totalorder %s14, 2
      %p74 = scmp.ne.s32.totalorder %s69, %s71
      %p75 = scmp.eq.s32.totalorder %s14, 0
      %p76 = por %p74, %p75
      %p77 = scmp.ne.s32.totalorder %s69, %s71
      %p78 = scmp.eq.s32.totalorder %s19, 2
      %p79 = por %p77, %p78
      %p80 = scmp.ne.s32.totalorder %s71, %s72
      %p81 = scmp.eq.s32.totalorder %s19, 0
      %p82 = por %p80, %p81
      %p83 = scmp.ne.s32.totalorder %s71, %s72
      %p84 = scmp.eq.s32.totalorder %s20, 2
      %p85 = por %p83, %p84
      %p87 = scmp.ne.s32.totalorder %s72, %s86
      %p88 = scmp.eq.s32.totalorder %s20, 0
      %p89 = por %p87, %p88
      %s91 = sadd.s32 %s90, 1
      %p94 = scmp.eq.s32.totalorder %s14, 2
      %p95 = scmp.ne.s32.totalorder %s90, %s92
      %p96 = scmp.eq.s32.totalorder %s14, 0
      %p97 = por %p95, %p96
      %p98 = scmp.ne.s32.totalorder %s90, %s92
      %p99 = scmp.eq.s32.totalorder %s19, 2
      %p100 = por %p98, %p99
      %p101 = scmp.ne.s32.totalorder %s92, %s93
      %p102 = scmp.eq.s32.totalorder %s19, 0
      %p103 = por %p101, %p102
      %p104 = scmp.ne.s32.totalorder %s92, %s93
      %p105 = scmp.eq.s32.totalorder %s20, 2
      %p106 = por %p104, %p105
      %p108 = scmp.ne.s32.totalorder %s93, %s107
      %p109 = scmp.eq.s32.totalorder %s20, 0
      %p110 = por %p108, %p109
      %s112 = sadd.s32 %s111, 1
      %p115 = scmp.eq.s32.totalorder %s14, 2
      %p116 = scmp.ne.s32.totalorder %s111, %s113
      %p117 = scmp.eq.s32.totalorder %s14, 0
      %p118 = por %p116, %p117
      %p119 = scmp.ne.s32.totalorder %s111, %s113
      %p120 = scmp.eq.s32.totalorder %s19, 2
      %p121 = por %p119, %p120
      %p122 = scmp.ne.s32.totalorder %s113, %s114
      %p123 = scmp.eq.s32.totalorder %s19, 0
      %p124 = por %p122, %p123
      %p125 = scmp.ne.s32.totalorder %s113, %s114
      %p126 = scmp.eq.s32.totalorder %s20, 2
      %p127 = por %p125, %p126
      %p129 = scmp.ne.s32.totalorder %s114, %s128
      %p130 = scmp.eq.s32.totalorder %s20, 0
      %p131 = por %p129, %p130
      %s132 = ssub.s32 %s14, %s21
      %p133 = scmp.eq.s32.totalorder %s132, 0
      %s135 = sadd.s32 %s134, 1
      %s136 = scalar_select %p133, %s134, %s135
      %p139 = pneg %p133
      %p140 = scmp.eq.s32.totalorder %s14, 2
      %p141 = por %p139, %p140
      %p142 = scmp.ne.s32.totalorder %s134, %s137
      %p143 = scmp.eq.s32.totalorder %s14, 0
      %p144 = por %p142, %p143
      %p145 = scmp.ne.s32.totalorder %s134, %s137
      %p146 = scmp.eq.s32.totalorder %s19, 2
      %p147 = por %p145, %p146
      %p148 = scmp.ne.s32.totalorder %s137, %s138
      %p149 = scmp.eq.s32.totalorder %s19, 0
      %p150 = por %p148, %p149
      %p151 = scmp.ne.s32.totalorder %s137, %s138
      %p152 = scmp.eq.s32.totalorder %s20, 2
      %p153 = por %p151, %p152
      %p155 = scmp.ne.s32.totalorder %s138, %s154
      %p156 = scmp.eq.s32.totalorder %s20, 0
      %p157 = por %p155, %p156
      %p158 = scmp.le.s32.totalorder 1, %s14
      %p159 = scmp.lt.s32.totalorder %s14, 4
      %p160 = pnand %p158, %p159
      %p161 = pneg %p160
      // Predicated region
      $region9: #{tpu_custom_call.1} parent=5 // pred_check
        _
      $region10: #{tpu_custom_call.1} parent=5 // pred_check_branch
        %163 = sbr.rel (%p160) target = $region12
      $region11: #{tpu_custom_call.1} parent=5 // pred_region
        %s164 = ssub.s32 %s14, 1
        // Predicated region
        $region13: #{tpu_custom_call.1} parent=11 // pred_check
          %p165 = pneg %p61
        $region14: #{tpu_custom_call.1} parent=11 // pred_check_branch
          %167 = sbr.rel (%p165) target = $region16
        $region15: #{tpu_custom_call.1} parent=11 // pred_region
          _
        $region16: #{tpu_custom_call.1} parent=11 // pred_fallthru
          _
        // Predicated region
        $region17: #{tpu_custom_call.1} parent=11 // pred_check
          %p168 = pneg %p82
        $region18: #{tpu_custom_call.1} parent=11 // pred_check_branch
          %170 = sbr.rel (%p168) target = $region20
        $region19: #{tpu_custom_call.1} parent=11 // pred_region
          _
        $region20: #{tpu_custom_call.1} parent=11 // pred_fallthru
          _
        // Predicated region
        $region21: #{tpu_custom_call.1} parent=11 // pred_check
          %p171 = pneg %p103
        $region22: #{tpu_custom_call.1} parent=11 // pred_check_branch
          %173 = sbr.rel (%p171) target = $region24
        $region23: #{tpu_custom_call.1} parent=11 // pred_region
          _
        $region24: #{tpu_custom_call.1} parent=11 // pred_fallthru
          _
        // Predicated region
        $region25: #{tpu_custom_call.1} parent=11 // pred_check
          %p174 = pneg %p124
        $region26: #{tpu_custom_call.1} parent=11 // pred_check_branch
          %176 = sbr.rel (%p174) target = $region28
        $region27: #{tpu_custom_call.1} parent=11 // pred_region
          _
        $region28: #{tpu_custom_call.1} parent=11 // pred_fallthru
          _
      $region12: #{tpu_custom_call.1} parent=5 // pred_fallthru
        _
      %p177 = scmp.lt.s32.totalorder %s14, 3
      // Predicated region
      $region29: #{tpu_custom_call.1} parent=5 // pred_check
        %p178 = pneg %p177
      $region30: #{tpu_custom_call.1} parent=5 // pred_check_branch
        %180 = sbr.rel (%p178) target = $region32
      $region31: #{tpu_custom_call.1} parent=5 // pred_region
        // Predicated region
        $region33: #{tpu_custom_call.1} parent=31 // pred_check
          %p181 = pneg %p34
        $region34: #{tpu_custom_call.1} parent=31 // pred_check_branch
          %183 = sbr.rel (%p181) target = $region36
        $region35: #{tpu_custom_call.1} parent=31 // pred_region
          %s184 = smul.u32 2, %s14
          %s185 = ssub.s32 5, %s184
          %p186 = scmp.lt.s32.totalorder %s185, 2
          %s187 = scalar_select %p186, %s185, 2
          %s188 = smul.u32 128, %s187
          %p189 = scmp.lt.s32.totalorder %s184, 4
          %s190 = scalar_select %p189, %s184, 4
          %s191 = smul.addr %s190, 8
          %s192 = scalar_lea.vmem %s0, %s191
          %s193 = smul.u32 2, %s14
          %s194 = ssub.s32 5, %s193
          %p195 = scmp.lt.s32.totalorder %s194, 2
          %s196 = scalar_select %p195, %s194, 2
          %s197 = smul.u32 128, %s196
        $region36: #{tpu_custom_call.1} parent=31 // pred_fallthru
          _
      $region32: #{tpu_custom_call.1} parent=5 // pred_fallthru
        _
      %p198 = scmp.le.s32.totalorder 1, %s14
      %p199 = scmp.lt.s32.totalorder %s14, 4
      %p200 = pnand %p198, %p199
      %p201 = pneg %p200
      // Predicated region
      $region37: #{tpu_custom_call.1} parent=5 // pred_check
        _
      $region38: #{tpu_custom_call.1} parent=5 // pred_check_branch
        %203 = sbr.rel (%p200) target = $region40
      $region39: #{tpu_custom_call.1} parent=5 // pred_region
        %s204 = ssub.s32 %s14, 1
        %s205 = smul.u32 2, %s19
        %s206 = ssub.s32 5, %s205
        %p207 = scmp.lt.s32.totalorder %s206, 2
        %s208 = scalar_select %p207, %s206, 2
        %s209 = smul.u32 128, %s208
        %p210 = scmp.lt.s32.totalorder %s205, 4
        %s211 = scalar_select %p210, %s205, 4
        %s212 = smul.addr %s211, 8
        %s213 = scalar_lea.vmem %s0, %s212
        %p214 = pneg %p40
        %p215 = pneg %p37
        %p216 = pneg %p61
        %p217 = pneg %p58
        %p218 = pneg %p82
        %p219 = pneg %p79
        %p220 = pneg %p103
        %p221 = pneg %p100
        %p222 = pneg %p124
        %p223 = pneg %p121
        %p224 = pneg %p150
        %p225 = pneg %p147
        %s226 = sand.u32 %s137, 1
        %s227 = scalar_lea.sflag [#allocation3], %s226
        %s228 = sand.u32 %s137, 1
        %s229 = smul.addr %s228, 8
        %s230 = scalar_lea.vmem [#allocation2], %s229
        %s231 = smul.u32 2, %s19
        %s232 = ssub.s32 5, %s231
        %p233 = scmp.lt.s32.totalorder %s232, 2
        %s234 = scalar_select %p233, %s232, 2
        %s235 = smul.u32 128, %s234
        %p236 = scmp.lt.s32.totalorder %s231, 4
        %s237 = scalar_select %p236, %s231, 4
        %s238 = smul.addr %s237, 8
        %s239 = scalar_lea.vmem %s0, %s238
        %s240 = smul.u32 2, %s19
        %s241 = ssub.s32 5, %s240
        %p242 = scmp.lt.s32.totalorder %s241, 2
        %s243 = scalar_select %p242, %s241, 2
        %s244 = smul.u32 128, %s243
        %s245 = smul.u32 2, %s19
        %s246 = ssub.s32 5, %s245
        %p247 = scmp.lt.s32.totalorder %s246, 2
        %s248 = scalar_select %p247, %s246, 2
        %s249 = smul.u32 64, %s248
        %v251 = vld [vmem:[%s239] sm:$0xff]
        %v252 = vld [vmem:[%s239 + $0x8] sm:$0xff]
        %v253 = vpack.c.bf16 %v252, %v251
        %v254 = vld [vmem:[%s1] sm:$0xf]
        %v255 = vld [vmem:[%s1 + $0x4] sm:$0xf]
        %v256 = vld [vmem:[%s1 + $0x8] sm:$0xf]
        %v257 = vld [vmem:[%s1 + $0xc] sm:$0xf]
        %v258 = vld [vmem:[%s2] sm:$0x1]
        %v260 = vlaneseq
        %v261 = vshrl.u32 %v260, 7
        %v262 = vsub.s32 0, %v261
        %v263 = vrot.slane %v258, %v262
        %v269 = vunpack.c.l.b16 %v254
        %v270 = vunpack.c.l.b16 %v255
        %v271 = vunpack.c.l.b16 %v256
        %v272 = vunpack.c.l.b16 %v257
        %v273 = vpack.c.b16 %v270, %v269
        %v274 = vpack.c.b16 %v272, %v271
        %vm277 = vcmask 261120
        %v279 = vsel %vm277, %v253, 0
        %281 = vmatprep.subr.bf16.mxu0 0
        %282 = vmatpush1.bf16.msra.mxu0 %v273
        %283 = vmatprep.subr.bf16.mxu0 0
        %284 = vmatpush1.bf16.msra.mxu0 %v274
        %285 = vmatprep.subr.bf16.mxu0 0
        %286 = vmatpush1.bf16.msra.mxu0 0
        %287 = vmatprep.subr.bf16.mxu0 0
        %288 = vmatpush1.bf16.msra.mxu0 0
        %289 = vmatprep.subr.bf16.mxu0 0
        %290 = vmatpush1.bf16.msra.mxu0 0
        %291 = vmatprep.subr.bf16.mxu0 0
        %292 = vmatpush1.bf16.msra.mxu0 0
        %293 = vmatprep.subr.bf16.mxu0 0
        %294 = vmatpush1.bf16.msra.mxu0 0
        %295 = vmatprep.subr.bf16.mxu0 0
        %296 = vmatpush1.bf16.msra.mxu0 0
        %297 = vmatprep.subr.bf16.mxu0 0
        %298 = vmatpush1.bf16.msra.mxu0 0
        %299 = vmatprep.subr.bf16.mxu0 0
        %300 = vmatpush1.bf16.msra.mxu0 0
        %301 = vmatprep.subr.bf16.mxu0 0
        %302 = vmatpush1.bf16.msra.mxu0 0
        %303 = vmatprep.subr.bf16.mxu0 0
        %304 = vmatpush1.bf16.msra.mxu0 0
        %305 = vmatprep.subr.bf16.mxu0 0
        %306 = vmatpush1.bf16.msra.mxu0 0
        %307 = vmatprep.subr.bf16.mxu0 0
        %308 = vmatpush1.bf16.msra.mxu0 0
        %309 = vmatprep.subr.bf16.mxu0 0
        %310 = vmatpush1.bf16.msra.mxu0 0
        %311 = vmatprep.subr.bf16.mxu0 0
        %312 = vmatpush1.bf16.msra.mxu0 0
        %313 = vmatprep.mubr.bf16.mxu0 0
        %314 = vmatmul.mubr.bf16.gmra.mrb[0].mxu0 %v279
        %v315 = vpop.f32.mrb[0].mxu0
        %v316 = vadd.f32 %v263, %v315
        %v317 = vpop.f32.mrb[0].mxu0
        %v318 = vpop.f32.mrb[0].mxu0
        %v319 = vadd.f32 %v263, %v318
        %v320 = vpop.f32.mrb[0].mxu0
        %321 = vdwg.mxu0
        %v322 = vmax.f32 %v316, 0.0
        %v323 = vmax.f32 %v319, 0.0
        %v324 = vpack.c.bf16 %v323, %v322
        %v325 = vld [vmem:[%s3] sm:$0xf]
        %v326 = vld [vmem:[%s3 + $0x4] sm:$0xf]
        %v327 = vld [vmem:[%s3 + $0x8] sm:$0xf]
        %v328 = vld [vmem:[%s3 + $0xc] sm:$0xf]
        %v329 = vld [vmem:[%s3 + $0x10] sm:$0xf]
        %v330 = vld [vmem:[%s3 + $0x14] sm:$0xf]
        %v331 = vld [vmem:[%s3 + $0x18] sm:$0xf]
        %v332 = vld [vmem:[%s3 + $0x1c] sm:$0xf]
        %v333 = vld [vmem:[%s3 + $0x20] sm:$0xf]
        %v334 = vld [vmem:[%s3 + $0x24] sm:$0xf]
        %v335 = vld [vmem:[%s3 + $0x28] sm:$0xf]
        %v336 = vld [vmem:[%s3 + $0x2c] sm:$0xf]
        %v337 = vld [vmem:[%s3 + $0x30] sm:$0xf]
        %v338 = vld [vmem:[%s3 + $0x34] sm:$0xf]
        %v339 = vld [vmem:[%s3 + $0x38] sm:$0xf]
        %v340 = vld [vmem:[%s3 + $0x3c] sm:$0xf]
        %v341 = vld [vmem:[%s4] sm:$0x1]
        %v343 = vlaneseq
        %v344 = vshrl.u32 %v343, 7
        %v345 = vsub.s32 0, %v344
        %v346 = vrot.slane %v341, %v345
        %v364 = vunpack.c.l.b16 %v325
        %v365 = vunpack.c.l.b16 %v326
        %v366 = vunpack.c.l.b16 %v327
        %v367 = vunpack.c.l.b16 %v328
        %v368 = vunpack.c.l.b16 %v329
        %v369 = vunpack.c.l.b16 %v330
        %v370 = vunpack.c.l.b16 %v331
        %v371 = vunpack.c.l.b16 %v332
        %v372 = vunpack.c.l.b16 %v333
        %v373 = vunpack.c.l.b16 %v334
        %v374 = vunpack.c.l.b16 %v335
        %v375 = vunpack.c.l.b16 %v336
        %v376 = vunpack.c.l.b16 %v337
        %v377 = vunpack.c.l.b16 %v338
        %v378 = vunpack.c.l.b16 %v339
        %v379 = vunpack.c.l.b16 %v340
        %v380 = vpack.c.b16 %v365, %v364
        %v381 = vpack.c.b16 %v367, %v366
        %v382 = vpack.c.b16 %v369, %v368
        %v383 = vpack.c.b16 %v371, %v370
        %v384 = vpack.c.b16 %v373, %v372
        %v385 = vpack.c.b16 %v375, %v374
        %v386 = vpack.c.b16 %v377, %v376
        %v387 = vpack.c.b16 %v379, %v378
        %396 = vmatprep.subr.bf16.mxu0 0
        %397 = vmatpush1.bf16.msra.mxu0 %v380
        %398 = vmatprep.subr.bf16.mxu0 0
        %399 = vmatpush1.bf16.msra.mxu0 %v381
        %400 = vmatprep.subr.bf16.mxu0 0
        %401 = vmatpush1.bf16.msra.mxu0 %v382
        %402 = vmatprep.subr.bf16.mxu0 0
        %403 = vmatpush1.bf16.msra.mxu0 %v383
        %404 = vmatprep.subr.bf16.mxu0 0
        %405 = vmatpush1.bf16.msra.mxu0 %v384
        %406 = vmatprep.subr.bf16.mxu0 0
        %407 = vmatpush1.bf16.msra.mxu0 %v385
        %408 = vmatprep.subr.bf16.mxu0 0
        %409 = vmatpush1.bf16.msra.mxu0 %v386
        %410 = vmatprep.subr.bf16.mxu0 0
        %411 = vmatpush1.bf16.msra.mxu0 %v387
        %412 = vmatprep.subr.bf16.mxu0 0
        %413 = vmatpush1.bf16.msra.mxu0 0
        %414 = vmatprep.subr.bf16.mxu0 0
        %415 = vmatpush1.bf16.msra.mxu0 0
        %416 = vmatprep.subr.bf16.mxu0 0
        %417 = vmatpush1.bf16.msra.mxu0 0
        %418 = vmatprep.subr.bf16.mxu0 0
        %419 = vmatpush1.bf16.msra.mxu0 0
        %420 = vmatprep.subr.bf16.mxu0 0
        %421 = vmatpush1.bf16.msra.mxu0 0
        %422 = vmatprep.subr.bf16.mxu0 0
        %423 = vmatpush1.bf16.msra.mxu0 0
        %424 = vmatprep.subr.bf16.mxu0 0
        %425 = vmatpush1.bf16.msra.mxu0 0
        %426 = vmatprep.subr.bf16.mxu0 0
        %427 = vmatpush1.bf16.msra.mxu0 0
        %428 = vmatprep.mubr.bf16.mxu0 0
        %429 = vmatmul.mubr.bf16.gmra.mrb[0].mxu0 %v324
        %v430 = vpop.f32.mrb[0].mxu0
        %v431 = vadd.f32 %v346, %v430
        %v432 = vpop.f32.mrb[0].mxu0
        %v433 = vpop.f32.mrb[0].mxu0
        %v434 = vadd.f32 %v346, %v433
        %v435 = vpop.f32.mrb[0].mxu0
        %436 = vdwg.mxu0
        %v437 = vpack.c.bf16 %v434, %v431
        %v439 = vunpack.c.l.b16 %v437
        %v440 = vunpack.c.h.b16 %v437
        %v441 = vpack.c.b16 %v439, %v439
        %v442 = vpack.c.b16 %v440, %v440
        %445 = vst [vmem:[%s230] sm:$0xf] %v441
        %446 = vst [vmem:[%s230 + $0x4] sm:$0xf] %v442
        %s447 = sand.u32 %s137, 1
        %s448 = scalar_lea.sflag [#allocation3], %s447
        %s449 = sand.u32 %s137, 1
        %s450 = smul.addr %s449, 8
        %s451 = scalar_lea.vmem [#allocation2], %s450
        // Predicated region
        $region41: #{tpu_custom_call.1} parent=39 // pred_check
          %p452 = pneg %p147
        $region42: #{tpu_custom_call.1} parent=39 // pred_check_branch
          %454 = sbr.rel (%p452) target = $region44
        $region43: #{tpu_custom_call.1} parent=39 // pred_region
          %s455 = smul.u32 2, %s19
          %s456 = ssub.s32 5, %s455
          %p457 = scmp.lt.s32.totalorder %s456, 2
          %s458 = scalar_select %p457, %s456, 2
          %s459 = smul.u32 64, %s458
          %s461 = ssub.s32 128, %s459
          %462 = vsyncadd %s448, %s461
          %p463 = scmp.ne.s32.totalorder 0, %s459
          %s464 = smul.addr %s455, 64
          %s465 = scalar_lea.hbm %s5, %s464
          %s466 = smul.u32 4, %s458
          %s467 = sshll.u32 %s451, 4
          %s468 = int_to_ptr.vmem [resolvable:$true] %s467
          %s469 = sshll.u32 %s466, 4
          %473 = dma.vmem_to_hbm [thread:$0]  (%p463), %s468, %s469, %s465, %s448, 64, 64, 4
        $region44: #{tpu_custom_call.1} parent=39 // pred_fallthru
          _
      $region40: #{tpu_custom_call.1} parent=5 // pred_fallthru
        _
      %p474 = scmp.le.s32.totalorder 2, %s14
      // Predicated region
      $region45: #{tpu_custom_call.1} parent=5 // pred_check
        %p475 = pneg %p474
      $region46: #{tpu_custom_call.1} parent=5 // pred_check_branch
        %477 = sbr.rel (%p475) target = $region48
      $region47: #{tpu_custom_call.1} parent=5 // pred_region
        %s478 = ssub.s32 %s14, 2
        // Predicated region
        $region49: #{tpu_custom_call.1} parent=47 // pred_check
          %p479 = pneg %p153
        $region50: #{tpu_custom_call.1} parent=47 // pred_check_branch
          %481 = sbr.rel (%p479) target = $region52
        $region51: #{tpu_custom_call.1} parent=47 // pred_region
          %s482 = sand.u32 %s138, 1
          %s483 = scalar_lea.sflag [#allocation3], %s482
          %s484 = sand.u32 %s138, 1
          %s485 = smul.addr %s484, 8
          %s486 = scalar_lea.vmem [#allocation2], %s485
          %487 = dma.done %s483, 128
        $region52: #{tpu_custom_call.1} parent=47 // pred_fallthru
          _
      $region48: #{tpu_custom_call.1} parent=5 // pred_fallthru
        _
    $region6: #{tpu_custom_call.1} parent=1 // loop_footer
      %s18 = sadd.s32 1, %s14
    $region7: #{tpu_custom_call.1} parent=1 // loop_footer_branch
      %13 = sbr.rel target = $region3
    $region8: #{tpu_custom_call.1} parent=1 // loop_exit
      _
    %488 = vsyncpa [#allocation3], 1
    %s489 = scalar_lea.sflag [#allocation3], 1
    %490 = vsyncpa %s489, 1

</llo_original>
